<compile_context>
chip_gen: v7x
topology: tpu7x:2x2x1
jax: 0.10.0
libtpu: 0.0.40
codegen_flags: <defaults>
</compile_context>

<pallas_src>
import jax
import jax.numpy as jnp
from jax.experimental import pallas as pl
from jax.experimental.pallas import tpu as pltpu


# ---------------------------------------------------------------------------
# Fused Pallas kernel (factory: layer count / contraction order are static)
# ---------------------------------------------------------------------------
def make_fused_forward_kernel(num_layers, prop_first_flags):
    """Kernel computing log_softmax(readout(GCN_L(...GCN_1(X)...))) per graph."""

    def kernel(*refs):
        # refs = (a, x, w1, b1, ..., wL, bL, wr_pad, br_pad, out)
        a_ref, x_ref = refs[0], refs[1]
        o_ref = refs[-1]

        a = a_ref[...]                      # bf16 (N, N)
        h = x_ref[...]                      # bf16 (N, F_in)
        idx = 2
        for i in range(num_layers):
            w = refs[idx][...]              # bf16 (F_in, F_out)
            b = refs[idx + 1][...]          # f32  (1, F_out)
            idx += 2
            if prop_first_flags[i]:
                # (A @ H) @ W   -- fewer FLOPs when F_in <= F_out
                t = jnp.dot(a, h, preferred_element_type=jnp.float32)
                hf = jnp.dot(t.astype(jnp.bfloat16), w,
                             preferred_element_type=jnp.float32) + b
            else:
                # A @ (H @ W)   -- fewer FLOPs when F_in > F_out
                t = jnp.dot(h, w, preferred_element_type=jnp.float32)
                hf = jnp.dot(a, t.astype(jnp.bfloat16),
                             preferred_element_type=jnp.float32) + b
            hf = jnp.maximum(hf, 0.0)       # relu in f32 (portable VPU path)
            # F.dropout(out, training=False) -> identity in eval mode
            h = hf.astype(jnp.bfloat16)     # bf16 back into the MXU

        # readout (lane-padded to 128 classes; pad columns have f32 bias=-1e30)
        wr = refs[idx][...]                 # bf16 (hid, C_pad)
        br = refs[idx + 1][...]             # f32  (1, C_pad)
        logits = jnp.dot(h, wr, preferred_element_type=jnp.float32) + br

        # numerically-stable f32 log_softmax over dim=1 (padded lanes -> exp 0)
        m = jnp.max(logits, axis=1, keepdims=True)
        z = logits - m
        lse = jnp.log(jnp.sum(jnp.exp(z), axis=1, keepdims=True))
        o_ref[...] = z - lse

    return kernel


# ---------------------------------------------------------------------------
# Wrapper: one pallas_call with a "parallel" grid over graphs
# ---------------------------------------------------------------------------
@jax.jit
def gcnnet_forward(params, x, a_norm):
    """x: (G, N, F_in) node features, a_norm: (G, N, N) normalized adjacency."""
    g, n, f_in = x.shape
    convs = params["convs"]
    rw, rb = params["readout"]
    c = rw.shape[1]

    # pad readout to a lane-dense (>=128, multiple of 128) class axis
    c_pad = max(128, ((c + 127) // 128) * 128)
    rw_p = jnp.zeros((rw.shape[0], c_pad), jnp.float32).at[:, :c].set(rw)
    br_p = jnp.full((1, c_pad), -1e30, jnp.float32).at[:, :c].set(rb)  # f32!

    # static, per-layer contraction-order choice (exact-FLOP criterion)
    prop_first = tuple(int(w.shape[0]) <= int(w.shape[1]) for (w, _) in convs)
    kernel = make_fused_forward_kernel(len(convs), prop_first)

    # bf16 MXU operands; biases stay f32
    inputs = [a_norm.astype(jnp.bfloat16), x.astype(jnp.bfloat16)]
    in_specs = [
        pl.BlockSpec((None, n, n), lambda gi: (gi, 0, 0)),
        pl.BlockSpec((None, n, f_in), lambda gi: (gi, 0, 0)),
    ]
    weight_bytes = 0
    for (w, b) in convs:
        inputs += [w.astype(jnp.bfloat16), b.astype(jnp.float32)]
        in_specs += [
            pl.BlockSpec(tuple(w.shape), lambda gi: (0, 0)),  # resident
            pl.BlockSpec(tuple(b.shape), lambda gi: (0, 0)),  # resident
        ]
        weight_bytes += w.size * 2 + b.size * 4
    inputs += [rw_p.astype(jnp.bfloat16), br_p]
    in_specs += [
        pl.BlockSpec(tuple(rw_p.shape), lambda gi: (0, 0)),
        pl.BlockSpec(tuple(br_p.shape), lambda gi: (0, 0)),
    ]
    weight_bytes += rw_p.size * 2 + br_p.size * 4

    out_specs = pl.BlockSpec((None, n, c_pad), lambda gi: (gi, 0, 0))

    # explicit VMEM budget: double-buffered per-graph blocks + resident weights
    per_graph_block = n * n * 2 + n * f_in * 2 + n * c_pad * 4
    vmem_limit = min(max(2 * per_graph_block + weight_bytes + (8 << 20),
                         16 << 20), 48 << 20)

    # advisory cost estimate for the XLA scheduler
    flops = 0
    f_prev = f_in
    for i, (w, _) in enumerate(convs):
        f_out = int(w.shape[1])
        if prop_first[i]:
            flops += 2 * n * n * f_prev + 2 * n * f_prev * f_out
        else:
            flops += 2 * n * f_prev * f_out + 2 * n * n * f_out
        f_prev = f_out
    flops += 2 * n * f_prev * c_pad
    flops *= g
    cost = pl.CostEstimate(
        flops=flops,
        transcendentals=g * n * c_pad,
        bytes_accessed=g * per_graph_block + weight_bytes)

    out_padded = pl.pallas_call(
        kernel,
        out_shape=jax.ShapeDtypeStruct((g, n, c_pad), jnp.float32),
        grid_spec=pltpu.PrefetchScalarGridSpec(
            num_scalar_prefetch=0,
            grid=(g,),
            in_specs=in_specs,
            out_specs=out_specs),
        compiler_params=pltpu.CompilerParams(
            dimension_semantics=("parallel",),
            vmem_limit_bytes=vmem_limit),
        cost_estimate=cost,
    )(*inputs)

    return out_padded[:, :, :c]


# ---------------------------------------------------------------------------
# Glue: normalized adjacency + parameter init
# ---------------------------------------------------------------------------
def build_normalized_adjacency(edge_index, num_nodes, epsilon=1.0,
                               add_identity=True, normalize=True):
    # binary undirected adjacency (duplicate edges collapse to weight 1)
    src, dst = edge_index[0], edge_index[1]
    a = jnp.zeros((num_nodes, num_nodes), jnp.float32)
    a = a.at[src, dst].set(1.0)
    a = a.at[dst, src].set(1.0)
    if add_identity:
        a = a + epsilon * jnp.eye(num_nodes, dtype=jnp.float32)
    if normalize:
        deg = jnp.sum(a, axis=1)
        d_inv_sqrt = jnp.where(deg > 0, 1.0 / jnp.sqrt(deg), 0.0)
        a = a * d_inv_sqrt[:, None] * d_inv_sqrt[None, :]
    return a


def init_linear(key, fan_in, fan_out):
    kw, kb = jax.random.split(key)
    scale = jnp.sqrt(2.0 / (fan_in + fan_out)).astype(jnp.float32)
    w = jax.random.normal(kw, (fan_in, fan_out), jnp.float32) * scale
    b = jax.random.normal(kb, (1, fan_out), jnp.float32) * 0.01
    return w, b


def init_gcnnet_params(key, indim, hiddim, num_classes, num_layers):
    keys = jax.random.split(key, num_layers + 1)
    params = {"convs": [], "readout": None}
    dims = [indim] + [hiddim] * num_layers
    for i in range(num_layers):
        params["convs"].append(init_linear(keys[i], dims[i], dims[i + 1]))
    params["readout"] = init_linear(keys[-1], hiddim, num_classes)
    return params


# ---------------------------------------------------------------------------
if __name__ == "__main__":
    G = 4             # batch of graphs (grid axis)
    N = 64            # nodes per graph
    INDIM = 16        # input feature dim
    HIDDIM = 32       # hidden dim
    NUM_CLASSES = 8
    NUM_LAYERS = 2

    key = jax.random.PRNGKey(0)
    k_x, k_e, k_p = jax.random.split(key, 3)

    # deterministic node features for all graphs
    x = jax.random.normal(k_x, (G, N, INDIM), jnp.float32)

    # deterministic edge_index per graph: a ring plus some random chords
    ring_src = jnp.arange(N, dtype=jnp.int32)
    ring_dst = (ring_src + 1) % N
    a_list = []
    for gi in range(G):
        kg = jax.random.fold_in(k_e, gi)
        extra_src = jax.random.randint(kg, (N,), 0, N, dtype=jnp.int32)
        extra_dst = jax.random.randint(jax.random.fold_in(kg, 1), (N,), 0, N,
                                       dtype=jnp.int32)
        edge_index = jnp.stack(
            [jnp.concatenate([ring_src, extra_src]),
             jnp.concatenate([ring_dst, extra_dst])], axis=0)
        a_list.append(build_normalized_adjacency(
            edge_index, N, epsilon=1.0, add_identity=True, normalize=True))
    a_norm = jnp.stack(a_list, axis=0)          # (G, N, N)

    params = init_gcnnet_params(k_p, INDIM, HIDDIM, NUM_CLASSES, NUM_LAYERS)

    out = gcnnet_forward(params, x, a_norm)
    jax.block_until_ready(out)

    assert out.shape == (G, N, NUM_CLASSES)
    # rows of log_softmax must exp-sum to 1
    assert bool(jnp.allclose(jnp.sum(jnp.exp(out), axis=-1), 1.0, atol=1e-3))
    print("KERNEL_OK")
</pallas_src>

<mosaic_0001>
module attributes {stable_mosaic.version = 11 : i64} {
  func.func @kernel(%arg0: i32, %arg1: memref<1x64x64xbf16, #tpu.memory_space<vmem>>, %arg2: memref<1x64x16xbf16, #tpu.memory_space<vmem>>, %arg3: memref<16x32xbf16, #tpu.memory_space<vmem>>, %arg4: memref<1x32xf32, #tpu.memory_space<vmem>>, %arg5: memref<32x32xbf16, #tpu.memory_space<vmem>>, %arg6: memref<1x32xf32, #tpu.memory_space<vmem>>, %arg7: memref<32x128xbf16, #tpu.memory_space<vmem>>, %arg8: memref<1x128xf32, #tpu.memory_space<vmem>>, %arg9: memref<1x64x128xf32, #tpu.memory_space<vmem>>) attributes {dimension_semantics = [#tpu.dimension_semantics<parallel>], iteration_bounds = array<i64: 4>, scalar_prefetch = 0 : i64, scratch_operands = 0 : i64, tpu.core_type = #tpu.core_type<tc>, window_params = [{transform_indices = @transform_0, window_bounds = array<i64: 1, 64, 64>}, {transform_indices = @transform_1, window_bounds = array<i64: 1, 64, 16>}, {pipeline_mode = #tpu.pipeline_mode<synchronous>, transform_indices = @transform_2, window_bounds = array<i64: 16, 32>}, {pipeline_mode = #tpu.pipeline_mode<synchronous>, transform_indices = @transform_3, window_bounds = array<i64: 1, 32>}, {pipeline_mode = #tpu.pipeline_mode<synchronous>, transform_indices = @transform_4, window_bounds = array<i64: 32, 32>}, {pipeline_mode = #tpu.pipeline_mode<synchronous>, transform_indices = @transform_5, window_bounds = array<i64: 1, 32>}, {pipeline_mode = #tpu.pipeline_mode<synchronous>, transform_indices = @transform_6, window_bounds = array<i64: 32, 128>}, {pipeline_mode = #tpu.pipeline_mode<synchronous>, transform_indices = @transform_7, window_bounds = array<i64: 1, 128>}, {transform_indices = @transform_8, window_bounds = array<i64: 1, 64, 128>}]} {
    %c0 = arith.constant 0 : index
    %c0_0 = arith.constant 0 : index
    %c0_1 = arith.constant 0 : index
    %0 = vector.load %arg1[%c0, %c0_0, %c0_1] : memref<1x64x64xbf16, #tpu.memory_space<vmem>>, vector<1x64x64xbf16>
    %1 = vector.shape_cast %0 : vector<1x64x64xbf16> to vector<64x64xbf16>
    %c0_2 = arith.constant 0 : index
    %c0_3 = arith.constant 0 : index
    %c0_4 = arith.constant 0 : index
    %2 = vector.load %arg2[%c0_2, %c0_3, %c0_4] : memref<1x64x16xbf16, #tpu.memory_space<vmem>>, vector<1x64x16xbf16>
    %3 = vector.shape_cast %2 : vector<1x64x16xbf16> to vector<64x16xbf16>
    %c0_5 = arith.constant 0 : index
    %c0_6 = arith.constant 0 : index
    %4 = vector.load %arg3[%c0_5, %c0_6] : memref<16x32xbf16, #tpu.memory_space<vmem>>, vector<16x32xbf16>
    %c0_7 = arith.constant 0 : index
    %c0_8 = arith.constant 0 : index
    %5 = vector.load %arg4[%c0_7, %c0_8] : memref<1x32xf32, #tpu.memory_space<vmem>>, vector<1x32xf32>
    %cst = arith.constant dense<0.000000e+00> : vector<64x16xf32>
    %6 = tpu.matmul %1, %3, %cst {dimension_numbers = #tpu.dot_dimension_numbers<[1], [0], [0], [1], [0, 0, 1, 1], [], []>} : vector<64x64xbf16>, vector<64x16xbf16>, vector<64x16xf32> -> vector<64x16xf32>
    %7 = arith.truncf %6 : vector<64x16xf32> to vector<64x16xbf16>
    %cst_9 = arith.constant dense<0.000000e+00> : vector<64x32xf32>
    %8 = tpu.matmul %7, %4, %cst_9 {dimension_numbers = #tpu.dot_dimension_numbers<[1], [0], [0], [1], [0, 0, 1, 1], [], []>} : vector<64x16xbf16>, vector<16x32xbf16>, vector<64x32xf32> -> vector<64x32xf32>
    %9 = vector.broadcast %5 : vector<1x32xf32> to vector<64x32xf32>
    %10 = arith.addf %8, %9 : vector<64x32xf32>
    %cst_10 = arith.constant 0.000000e+00 : f32
    %11 = vector.broadcast %cst_10 : f32 to vector<64x32xf32>
    %12 = arith.maximumf %10, %11 : vector<64x32xf32>
    %13 = arith.truncf %12 : vector<64x32xf32> to vector<64x32xbf16>
    %c0_11 = arith.constant 0 : index
    %c0_12 = arith.constant 0 : index
    %14 = vector.load %arg5[%c0_11, %c0_12] : memref<32x32xbf16, #tpu.memory_space<vmem>>, vector<32x32xbf16>
    %c0_13 = arith.constant 0 : index
    %c0_14 = arith.constant 0 : index
    %15 = vector.load %arg6[%c0_13, %c0_14] : memref<1x32xf32, #tpu.memory_space<vmem>>, vector<1x32xf32>
    %cst_15 = arith.constant dense<0.000000e+00> : vector<64x32xf32>
    %16 = tpu.matmul %1, %13, %cst_15 {dimension_numbers = #tpu.dot_dimension_numbers<[1], [0], [0], [1], [0, 0, 1, 1], [], []>} : vector<64x64xbf16>, vector<64x32xbf16>, vector<64x32xf32> -> vector<64x32xf32>
    %17 = arith.truncf %16 : vector<64x32xf32> to vector<64x32xbf16>
    %cst_16 = arith.constant dense<0.000000e+00> : vector<64x32xf32>
    %18 = tpu.matmul %17, %14, %cst_16 {dimension_numbers = #tpu.dot_dimension_numbers<[1], [0], [0], [1], [0, 0, 1, 1], [], []>} : vector<64x32xbf16>, vector<32x32xbf16>, vector<64x32xf32> -> vector<64x32xf32>
    %19 = vector.broadcast %15 : vector<1x32xf32> to vector<64x32xf32>
    %20 = arith.addf %18, %19 : vector<64x32xf32>
    %cst_17 = arith.constant 0.000000e+00 : f32
    %21 = vector.broadcast %cst_17 : f32 to vector<64x32xf32>
    %22 = arith.maximumf %20, %21 : vector<64x32xf32>
    %23 = arith.truncf %22 : vector<64x32xf32> to vector<64x32xbf16>
    %c0_18 = arith.constant 0 : index
    %c0_19 = arith.constant 0 : index
    %24 = vector.load %arg7[%c0_18, %c0_19] : memref<32x128xbf16, #tpu.memory_space<vmem>>, vector<32x128xbf16>
    %c0_20 = arith.constant 0 : index
    %c0_21 = arith.constant 0 : index
    %25 = vector.load %arg8[%c0_20, %c0_21] : memref<1x128xf32, #tpu.memory_space<vmem>>, vector<1x128xf32>
    %cst_22 = arith.constant dense<0.000000e+00> : vector<64x128xf32>
    %26 = tpu.matmul %23, %24, %cst_22 {dimension_numbers = #tpu.dot_dimension_numbers<[1], [0], [0], [1], [0, 0, 1, 1], [], []>} : vector<64x32xbf16>, vector<32x128xbf16>, vector<64x128xf32> -> vector<64x128xf32>
    %27 = vector.broadcast %25 : vector<1x128xf32> to vector<64x128xf32>
    %28 = arith.addf %26, %27 : vector<64x128xf32>
    %cst_23 = arith.constant dense<0xFF800000> : vector<64xf32>
    %29 = vector.multi_reduction <maximumf>, %28, %cst_23 [1] : vector<64x128xf32> to vector<64xf32>
    %30 = vector.shape_cast %29 : vector<64xf32> to vector<64x1xf32>
    %31 = vector.broadcast %30 : vector<64x1xf32> to vector<64x128xf32>
    %32 = arith.subf %28, %31 : vector<64x128xf32>
    %33 = math.exp %32 : vector<64x128xf32>
    %cst_24 = arith.constant dense<0.000000e+00> : vector<64xf32>
    %34 = vector.multi_reduction <add>, %33, %cst_24 [1] : vector<64x128xf32> to vector<64xf32>
    %35 = vector.shape_cast %34 : vector<64xf32> to vector<64x1xf32>
    %36 = math.log %35 : vector<64x1xf32>
    %37 = vector.broadcast %36 : vector<64x1xf32> to vector<64x128xf32>
    %38 = arith.subf %32, %37 : vector<64x128xf32>
    %c0_25 = arith.constant 0 : index
    %c0_26 = arith.constant 0 : index
    %c0_27 = arith.constant 0 : index
    %39 = vector.load %arg9[%c0_25, %c0_26, %c0_27] : memref<1x64x128xf32, #tpu.memory_space<vmem>>, vector<1x64x128xf32>
    %40 = vector.shape_cast %39 : vector<1x64x128xf32> to vector<64x128xf32>
    %41 = vector.shape_cast %38 : vector<64x128xf32> to vector<1x64x128xf32>
    tpu.vector_store %arg9[%c0_25, %c0_26, %c0_27], %41 {strides = array<i32>} : memref<1x64x128xf32, #tpu.memory_space<vmem>>, vector<1x64x128xf32>,
    return
  }
  func.func @transform_0(%arg0: i32) -> (i32, i32, i32) {
    %c0_i32 = arith.constant 0 : i32
    %c0_i32_0 = arith.constant 0 : i32
    %c0_i32_1 = arith.constant 0 : i32
    return %arg0, %c0_i32, %c0_i32_0 : i32, i32, i32
  }
  func.func @transform_1(%arg0: i32) -> (i32, i32, i32) {
    %c0_i32 = arith.constant 0 : i32
    %c0_i32_0 = arith.constant 0 : i32
    %c0_i32_1 = arith.constant 0 : i32
    return %arg0, %c0_i32, %c0_i32_0 : i32, i32, i32
  }
  func.func @transform_2(%arg0: i32) -> (i32, i32) {
    %c0_i32 = arith.constant 0 : i32
    %c0_i32_0 = arith.constant 0 : i32
    %c0_i32_1 = arith.constant 0 : i32
    return %c0_i32, %c0_i32_0 : i32, i32
  }
  func.func @transform_3(%arg0: i32) -> (i32, i32) {
    %c0_i32 = arith.constant 0 : i32
    %c0_i32_0 = arith.constant 0 : i32
    %c0_i32_1 = arith.constant 0 : i32
    return %c0_i32, %c0_i32_0 : i32, i32
  }
  func.func @transform_4(%arg0: i32) -> (i32, i32) {
    %c0_i32 = arith.constant 0 : i32
    %c0_i32_0 = arith.constant 0 : i32
    %c0_i32_1 = arith.constant 0 : i32
    return %c0_i32, %c0_i32_0 : i32, i32
  }
  func.func @transform_5(%arg0: i32) -> (i32, i32) {
    %c0_i32 = arith.constant 0 : i32
    %c0_i32_0 = arith.constant 0 : i32
    %c0_i32_1 = arith.constant 0 : i32
    return %c0_i32, %c0_i32_0 : i32, i32
  }
  func.func @transform_6(%arg0: i32) -> (i32, i32) {
    %c0_i32 = arith.constant 0 : i32
    %c0_i32_0 = arith.constant 0 : i32
    %c0_i32_1 = arith.constant 0 : i32
    return %c0_i32, %c0_i32_0 : i32, i32
  }
  func.func @transform_7(%arg0: i32) -> (i32, i32) {
    %c0_i32 = arith.constant 0 : i32
    %c0_i32_0 = arith.constant 0 : i32
    %c0_i32_1 = arith.constant 0 : i32
    return %c0_i32, %c0_i32_0 : i32, i32
  }
  func.func @transform_8(%arg0: i32) -> (i32, i32, i32) {
    %c0_i32 = arith.constant 0 : i32
    %c0_i32_0 = arith.constant 0 : i32
    %c0_i32_1 = arith.constant 0 : i32
    return %arg0, %c0_i32, %c0_i32_0 : i32, i32, i32
  }
}

</mosaic_0001>

<llo_original>
// kernel: gcnnet_forward.1
$region0: #{gcnnet_forward.1}
  #allocation0 [shape = 'u32[]', space=smem, size = 0x4, offset = 0x4, fixed_abs, tag = 'smem constant byte address 0x4 - core index']
  #allocation1 [shape = 'u32[144,128]{1,0:T(1,128)}', space=vmem, size = 0x12000, scoped, tag = 'internal scratch']
  %s0 = inlined_call_operand.vmem [shape: bf16[4,64,64], index: 0, kind: input, shape index: {}]
  %s1 = inlined_call_operand.vmem [shape: bf16[4,64,16], index: 1, kind: input, shape index: {}]
  %s2 = inlined_call_operand.vmem [shape: bf16[16,32], index: 2, kind: input, shape index: {}]
  %s3 = inlined_call_operand.vmem [shape: f32[1,32], index: 3, kind: input, shape index: {}]
  %s4 = inlined_call_operand.vmem [shape: bf16[32,32], index: 4, kind: input, shape index: {}]
  %s5 = inlined_call_operand.vmem [shape: f32[1,32], index: 5, kind: input, shape index: {}]
  %s6 = inlined_call_operand.vmem [shape: bf16[32,128], index: 6, kind: input, shape index: {}]
  %s7 = inlined_call_operand.vmem [shape: f32[1,128], index: 7, kind: input, shape index: {}]
  %s8 = inlined_call_operand.vmem [shape: f32[4,64,128], index: 8, kind: output, shape index: {}]
  %s9 = sld [smem:[#allocation0]]
  $region65: #{gcnnet_forward.1} parent=0
    _
  %s11 = ssub.s32 1, %s9
  %s12 = scalar_select 0, %s11, %s9
  loop: start=0, step=1, limit=6
  $region2: #{gcnnet_forward.1} parent=0 // loop_pre_header
    _
  $region3: #{gcnnet_forward.1} parent=0 // loop_header
    %s14 = sphi 0, %s18
    %p15 = scmp.ge.s32.totalorder %s14, 6
    %s24 = sphi 0, %s26
    %s27 = sphi 0, %s24
    %s28 = sphi 0, %s27
    %s44 = sphi 0, %s28
    %s50 = sphi 0, %s52
    %s53 = sphi 0, %s50
    %s54 = sphi 0, %s53
    %s70 = sphi 0, %s54
    %s74 = sphi 0, %s74
    %s76 = sphi 0, %s74
    %s77 = sphi 0, %s76
    %s91 = sphi 0, %s77
    %s95 = sphi 0, %s95
    %s97 = sphi 0, %s95
    %s98 = sphi 0, %s97
    %s112 = sphi 0, %s98
    %s116 = sphi 0, %s116
    %s118 = sphi 0, %s116
    %s119 = sphi 0, %s118
    %s133 = sphi 0, %s119
    %s137 = sphi 0, %s137
    %s139 = sphi 0, %s137
    %s140 = sphi 0, %s139
    %s154 = sphi 0, %s140
    %s158 = sphi 0, %s158
    %s160 = sphi 0, %s158
    %s161 = sphi 0, %s160
    %s175 = sphi 0, %s161
    %s179 = sphi 0, %s179
    %s181 = sphi 0, %s179
    %s182 = sphi 0, %s181
    %s196 = sphi 0, %s182
    %s202 = sphi 0, %s204
    %s205 = sphi 0, %s202
    %s206 = sphi 0, %s205
    %s222 = sphi 0, %s206
  $region4: #{gcnnet_forward.1} parent=0 // loop_header_branch
    %17 = sbr.rel (%p15) target = $region8
  $region5: #{gcnnet_forward.1} parent=0 // loop_body
    %s19 = ssub.s32 %s14, 1
    %s20 = ssub.s32 %s14, 2
    %s21 = sadd.s32 %s14, 1
    %s22 = ssub.s32 %s14, %s21
    %p23 = scmp.eq.s32.totalorder %s22, 0
    %s25 = sadd.s32 %s24, 1
    %s26 = scalar_select %p23, %s24, %s25
    %p29 = pneg %p23
    %p30 = scmp.eq.s32.totalorder %s14, 3
    %p31 = por %p29, %p30
    %p32 = scmp.ne.s32.totalorder %s24, %s27
    %p33 = scmp.eq.s32.totalorder %s14, 0
    %p34 = por %p32, %p33
    %p35 = scmp.ne.s32.totalorder %s24, %s27
    %p36 = scmp.eq.s32.totalorder %s19, 3
    %p37 = por %p35, %p36
    %p38 = scmp.ne.s32.totalorder %s27, %s28
    %p39 = scmp.eq.s32.totalorder %s19, 0
    %p40 = por %p38, %p39
    %p41 = scmp.ne.s32.totalorder %s27, %s28
    %p42 = scmp.eq.s32.totalorder %s20, 3
    %p43 = por %p41, %p42
    %p45 = scmp.ne.s32.totalorder %s28, %s44
    %p46 = scmp.eq.s32.totalorder %s20, 0
    %p47 = por %p45, %p46
    %s48 = ssub.s32 %s14, %s21
    %p49 = scmp.eq.s32.totalorder %s48, 0
    %s51 = sadd.s32 %s50, 1
    %s52 = scalar_select %p49, %s50, %s51
    %p55 = pneg %p49
    %p56 = scmp.eq.s32.totalorder %s14, 3
    %p57 = por %p55, %p56
    %p58 = scmp.ne.s32.totalorder %s50, %s53
    %p59 = scmp.eq.s32.totalorder %s14, 0
    %p60 = por %p58, %p59
    %p61 = scmp.ne.s32.totalorder %s50, %s53
    %p62 = scmp.eq.s32.totalorder %s19, 3
    %p63 = por %p61, %p62
    %p64 = scmp.ne.s32.totalorder %s53, %s54
    %p65 = scmp.eq.s32.totalorder %s19, 0
    %p66 = por %p64, %p65
    %p67 = scmp.ne.s32.totalorder %s53, %s54
    %p68 = scmp.eq.s32.totalorder %s20, 3
    %p69 = por %p67, %p68
    %p71 = scmp.ne.s32.totalorder %s54, %s70
    %p72 = scmp.eq.s32.totalorder %s20, 0
    %p73 = por %p71, %p72
    %s75 = sadd.s32 %s74, 1
    %p78 = scmp.eq.s32.totalorder %s14, 3
    %p79 = scmp.ne.s32.totalorder %s74, %s76
    %p80 = scmp.eq.s32.totalorder %s14, 0
    %p81 = por %p79, %p80
    %p82 = scmp.ne.s32.totalorder %s74, %s76
    %p83 = scmp.eq.s32.totalorder %s19, 3
    %p84 = por %p82, %p83
    %p85 = scmp.ne.s32.totalorder %s76, %s77
    %p86 = scmp.eq.s32.totalorder %s19, 0
    %p87 = por %p85, %p86
    %p88 = scmp.ne.s32.totalorder %s76, %s77
    %p89 = scmp.eq.s32.totalorder %s20, 3
    %p90 = por %p88, %p89
    %p92 = scmp.ne.s32.totalorder %s77, %s91
    %p93 = scmp.eq.s32.totalorder %s20, 0
    %p94 = por %p92, %p93
    %s96 = sadd.s32 %s95, 1
    %p99 = scmp.eq.s32.totalorder %s14, 3
    %p100 = scmp.ne.s32.totalorder %s95, %s97
    %p101 = scmp.eq.s32.totalorder %s14, 0
    %p102 = por %p100, %p101
    %p103 = scmp.ne.s32.totalorder %s95, %s97
    %p104 = scmp.eq.s32.totalorder %s19, 3
    %p105 = por %p103, %p104
    %p106 = scmp.ne.s32.totalorder %s97, %s98
    %p107 = scmp.eq.s32.totalorder %s19, 0
    %p108 = por %p106, %p107
    %p109 = scmp.ne.s32.totalorder %s97, %s98
    %p110 = scmp.eq.s32.totalorder %s20, 3
    %p111 = por %p109, %p110
    %p113 = scmp.ne.s32.totalorder %s98, %s112
    %p114 = scmp.eq.s32.totalorder %s20, 0
    %p115 = por %p113, %p114
    %s117 = sadd.s32 %s116, 1
    %p120 = scmp.eq.s32.totalorder %s14, 3
    %p121 = scmp.ne.s32.totalorder %s116, %s118
    %p122 = scmp.eq.s32.totalorder %s14, 0
    %p123 = por %p121, %p122
    %p124 = scmp.ne.s32.totalorder %s116, %s118
    %p125 = scmp.eq.s32.totalorder %s19, 3
    %p126 = por %p124, %p125
    %p127 = scmp.ne.s32.totalorder %s118, %s119
    %p128 = scmp.eq.s32.totalorder %s19, 0
    %p129 = por %p127, %p128
    %p130 = scmp.ne.s32.totalorder %s118, %s119
    %p131 = scmp.eq.s32.totalorder %s20, 3
    %p132 = por %p130, %p131
    %p134 = scmp.ne.s32.totalorder %s119, %s133
    %p135 = scmp.eq.s32.totalorder %s20, 0
    %p136 = por %p134, %p135
    %s138 = sadd.s32 %s137, 1
    %p141 = scmp.eq.s32.totalorder %s14, 3
    %p142 = scmp.ne.s32.totalorder %s137, %s139
    %p143 = scmp.eq.s32.totalorder %s14, 0
    %p144 = por %p142, %p143
    %p145 = scmp.ne.s32.totalorder %s137, %s139
    %p146 = scmp.eq.s32.totalorder %s19, 3
    %p147 = por %p145, %p146
    %p148 = scmp.ne.s32.totalorder %s139, %s140
    %p149 = scmp.eq.s32.totalorder %s19, 0
    %p150 = por %p148, %p149
    %p151 = scmp.ne.s32.totalorder %s139, %s140
    %p152 = scmp.eq.s32.totalorder %s20, 3
    %p153 = por %p151, %p152
    %p155 = scmp.ne.s32.totalorder %s140, %s154
    %p156 = scmp.eq.s32.totalorder %s20, 0
    %p157 = por %p155, %p156
    %s159 = sadd.s32 %s158, 1
    %p162 = scmp.eq.s32.totalorder %s14, 3
    %p163 = scmp.ne.s32.totalorder %s158, %s160
    %p164 = scmp.eq.s32.totalorder %s14, 0
    %p165 = por %p163, %p164
    %p166 = scmp.ne.s32.totalorder %s158, %s160
    %p167 = scmp.eq.s32.totalorder %s19, 3
    %p168 = por %p166, %p167
    %p169 = scmp.ne.s32.totalorder %s160, %s161
    %p170 = scmp.eq.s32.totalorder %s19, 0
    %p171 = por %p169, %p170
    %p172 = scmp.ne.s32.totalorder %s160, %s161
    %p173 = scmp.eq.s32.totalorder %s20, 3
    %p174 = por %p172, %p173
    %p176 = scmp.ne.s32.totalorder %s161, %s175
    %p177 = scmp.eq.s32.totalorder %s20, 0
    %p178 = por %p176, %p177
    %s180 = sadd.s32 %s179, 1
    %p183 = scmp.eq.s32.totalorder %s14, 3
    %p184 = scmp.ne.s32.totalorder %s179, %s181
    %p185 = scmp.eq.s32.totalorder %s14, 0
    %p186 = por %p184, %p185
    %p187 = scmp.ne.s32.totalorder %s179, %s181
    %p188 = scmp.eq.s32.totalorder %s19, 3
    %p189 = por %p187, %p188
    %p190 = scmp.ne.s32.totalorder %s181, %s182
    %p191 = scmp.eq.s32.totalorder %s19, 0
    %p192 = por %p190, %p191
    %p193 = scmp.ne.s32.totalorder %s181, %s182
    %p194 = scmp.eq.s32.totalorder %s20, 3
    %p195 = por %p193, %p194
    %p197 = scmp.ne.s32.totalorder %s182, %s196
    %p198 = scmp.eq.s32.totalorder %s20, 0
    %p199 = por %p197, %p198
    %s200 = ssub.s32 %s14, %s21
    %p201 = scmp.eq.s32.totalorder %s200, 0
    %s203 = sadd.s32 %s202, 1
    %s204 = scalar_select %p201, %s202, %s203
    %p207 = pneg %p201
    %p208 = scmp.eq.s32.totalorder %s14, 3
    %p209 = por %p207, %p208
    %p210 = scmp.ne.s32.totalorder %s202, %s205
    %p211 = scmp.eq.s32.totalorder %s14, 0
    %p212 = por %p210, %p211
    %p213 = scmp.ne.s32.totalorder %s202, %s205
    %p214 = scmp.eq.s32.totalorder %s19, 3
    %p215 = por %p213, %p214
    %p216 = scmp.ne.s32.totalorder %s205, %s206
    %p217 = scmp.eq.s32.totalorder %s19, 0
    %p218 = por %p216, %p217
    %p219 = scmp.ne.s32.totalorder %s205, %s206
    %p220 = scmp.eq.s32.totalorder %s20, 3
    %p221 = por %p219, %p220
    %p223 = scmp.ne.s32.totalorder %s206, %s222
    %p224 = scmp.eq.s32.totalorder %s20, 0
    %p225 = por %p223, %p224
    %p226 = scmp.le.s32.totalorder 1, %s14
    %p227 = scmp.lt.s32.totalorder %s14, 5
    %p228 = pnand %p226, %p227
    %p229 = pneg %p228
    // Predicated region
    $region9: #{gcnnet_forward.1} parent=5 // pred_check
      _
    $region10: #{gcnnet_forward.1} parent=5 // pred_check_branch
      %231 = sbr.rel (%p228) target = $region12
    $region11: #{gcnnet_forward.1} parent=5 // pred_region
      %s232 = ssub.s32 %s14, 1
      // Predicated region
      $region13: #{gcnnet_forward.1} parent=11 // pred_check
        %p233 = pneg %p87
      $region14: #{gcnnet_forward.1} parent=11 // pred_check_branch
        %235 = sbr.rel (%p233) target = $region16
      $region15: #{gcnnet_forward.1} parent=11 // pred_region
        _
      $region16: #{gcnnet_forward.1} parent=11 // pred_fallthru
        _
      // Predicated region
      $region17: #{gcnnet_forward.1} parent=11 // pred_check
        %p236 = pneg %p108
      $region18: #{gcnnet_forward.1} parent=11 // pred_check_branch
        %238 = sbr.rel (%p236) target = $region20
      $region19: #{gcnnet_forward.1} parent=11 // pred_region
        _
      $region20: #{gcnnet_forward.1} parent=11 // pred_fallthru
        _
      // Predicated region
      $region21: #{gcnnet_forward.1} parent=11 // pred_check
        %p239 = pneg %p129
      $region22: #{gcnnet_forward.1} parent=11 // pred_check_branch
        %241 = sbr.rel (%p239) target = $region24
      $region23: #{gcnnet_forward.1} parent=11 // pred_region
        _
      $region24: #{gcnnet_forward.1} parent=11 // pred_fallthru
        _
      // Predicated region
      $region25: #{gcnnet_forward.1} parent=11 // pred_check
        %p242 = pneg %p150
      $region26: #{gcnnet_forward.1} parent=11 // pred_check_branch
        %244 = sbr.rel (%p242) target = $region28
      $region27: #{gcnnet_forward.1} parent=11 // pred_region
        _
      $region28: #{gcnnet_forward.1} parent=11 // pred_fallthru
        _
      // Predicated region
      $region29: #{gcnnet_forward.1} parent=11 // pred_check
        %p245 = pneg %p171
      $region30: #{gcnnet_forward.1} parent=11 // pred_check_branch
        %247 = sbr.rel (%p245) target = $region32
      $region31: #{gcnnet_forward.1} parent=11 // pred_region
        _
      $region32: #{gcnnet_forward.1} parent=11 // pred_fallthru
        _
      // Predicated region
      $region33: #{gcnnet_forward.1} parent=11 // pred_check
        %p248 = pneg %p192
      $region34: #{gcnnet_forward.1} parent=11 // pred_check_branch
        %250 = sbr.rel (%p248) target = $region36
      $region35: #{gcnnet_forward.1} parent=11 // pred_region
        _
      $region36: #{gcnnet_forward.1} parent=11 // pred_fallthru
        _
    $region12: #{gcnnet_forward.1} parent=5 // pred_fallthru
      _
    %p251 = scmp.lt.s32.totalorder %s14, 4
    // Predicated region
    $region37: #{gcnnet_forward.1} parent=5 // pred_check
      %p252 = pneg %p251
    $region38: #{gcnnet_forward.1} parent=5 // pred_check_branch
      %254 = sbr.rel (%p252) target = $region40
    $region39: #{gcnnet_forward.1} parent=5 // pred_region
      // Predicated region
      $region41: #{gcnnet_forward.1} parent=39 // pred_check
        %p255 = pneg %p34
      $region42: #{gcnnet_forward.1} parent=39 // pred_check_branch
        %257 = sbr.rel (%p255) target = $region44
      $region43: #{gcnnet_forward.1} parent=39 // pred_region
        %p258 = scmp.lt.s32.totalorder %s14, 3
        %s259 = scalar_select %p258, %s14, 3
        %s260 = smul.addr %s259, 8
        %s261 = smul.addr %s260, 4
        %s262 = scalar_lea.vmem %s0, %s261
      $region44: #{gcnnet_forward.1} parent=39 // pred_fallthru
        _
      // Predicated region
      $region45: #{gcnnet_forward.1} parent=39 // pred_check
        %p263 = pneg %p60
      $region46: #{gcnnet_forward.1} parent=39 // pred_check_branch
        %265 = sbr.rel (%p263) target = $region48
      $region47: #{gcnnet_forward.1} parent=39 // pred_region
        %p266 = scmp.lt.s32.totalorder %s14, 3
        %s267 = scalar_select %p266, %s14, 3
        %s268 = smul.addr %s267, 8
        %s269 = smul.addr %s268, 4
        %s270 = scalar_lea.vmem %s1, %s269
      $region48: #{gcnnet_forward.1} parent=39 // pred_fallthru
        _
    $region40: #{gcnnet_forward.1} parent=5 // pred_fallthru
      _
    %p271 = scmp.le.s32.totalorder 1, %s14
    %p272 = scmp.lt.s32.totalorder %s14, 5
    %p273 = pnand %p271, %p272
    %p274 = pneg %p273
    // Predicated region
    $region49: #{gcnnet_forward.1} parent=5 // pred_check
      _
    $region50: #{gcnnet_forward.1} parent=5 // pred_check_branch
      %276 = sbr.rel (%p273) target = $region52
    $region51: #{gcnnet_forward.1} parent=5 // pred_region
      %s277 = ssub.s32 %s14, 1
      %p278 = scmp.lt.s32.totalorder %s19, 3
      %s279 = scalar_select %p278, %s19, 3
      %s280 = smul.addr %s279, 8
      %s281 = smul.addr %s280, 4
      %s282 = scalar_lea.vmem %s0, %s281
      %p283 = pneg %p40
      %p284 = pneg %p37
      %p285 = scmp.lt.s32.totalorder %s19, 3
      %s286 = scalar_select %p285, %s19, 3
      %s287 = smul.addr %s286, 8
      %s288 = smul.addr %s287, 4
      %s289 = scalar_lea.vmem %s1, %s288
      %p290 = pneg %p66
      %p291 = pneg %p63
      %p292 = pneg %p87
      %p293 = pneg %p84
      %p294 = pneg %p108
      %p295 = pneg %p105
      %p296 = pneg %p129
      %p297 = pneg %p126
      %p298 = pneg %p150
      %p299 = pneg %p147
      %p300 = pneg %p171
      %p301 = pneg %p168
      %p302 = pneg %p192
      %p303 = pneg %p189
      %p304 = pneg %p218
      %p305 = pneg %p215
      %p306 = scmp.lt.s32.totalorder %s19, 3
      %s307 = scalar_select %p306, %s19, 3
      %s308 = smul.addr %s307, 8
      %s309 = smul.addr %s308, 8
      %s310 = scalar_lea.vmem %s8, %s309
      %p311 = scmp.lt.s32.totalorder %s19, 3
      %s312 = scalar_select %p311, %s19, 3
      %s313 = smul.addr %s312, 8
      %s314 = smul.addr %s313, 4
      %s315 = scalar_lea.vmem %s0, %s314
      %p316 = scmp.lt.s32.totalorder %s19, 3
      %s317 = scalar_select %p316, %s19, 3
      %s318 = smul.addr %s317, 8
      %s319 = smul.addr %s318, 4
      %s320 = scalar_lea.vmem %s1, %s319
      %p321 = scmp.lt.s32.totalorder %s19, 3
      %s322 = scalar_select %p321, %s19, 3
      %s323 = smul.addr %s322, 8
      %s324 = smul.addr %s323, 8
      %s325 = scalar_lea.vmem %s8, %s324
      %v327 = vld [vmem:[%s315] sm:$0xf]
      %v328 = vld [vmem:[%s315 + $0x4] sm:$0xf]
      %v329 = vld [vmem:[%s315 + $0x8] sm:$0xf]
      %v330 = vld [vmem:[%s315 + $0xc] sm:$0xf]
      %v331 = vld [vmem:[%s315 + $0x10] sm:$0xf]
      %v332 = vld [vmem:[%s315 + $0x14] sm:$0xf]
      %v333 = vld [vmem:[%s315 + $0x18] sm:$0xf]
      %v334 = vld [vmem:[%s315 + $0x1c] sm:$0xf]
      %v335 = vld [vmem:[%s320] sm:$0xf]
      %v336 = vld [vmem:[%s320 + $0x4] sm:$0xf]
      %v337 = vld [vmem:[%s320 + $0x8] sm:$0xf]
      %v338 = vld [vmem:[%s320 + $0xc] sm:$0xf]
      %v339 = vld [vmem:[%s320 + $0x10] sm:$0xf]
      %v340 = vld [vmem:[%s320 + $0x14] sm:$0xf]
      %v341 = vld [vmem:[%s320 + $0x18] sm:$0xf]
      %v342 = vld [vmem:[%s320 + $0x1c] sm:$0xf]
      %v343 = vld [vmem:[%s2] sm:$0xf]
      %v344 = vld [vmem:[%s2 + $0x4] sm:$0xf]
      %v345 = vld [vmem:[%s3] sm:$0x1]
      %v354 = vunpack.c.l.b16 %v327
      %v355 = vunpack.c.l.b16 %v328
      %v356 = vunpack.c.l.b16 %v329
      %v357 = vunpack.c.l.b16 %v330
      %v358 = vunpack.c.l.b16 %v331
      %v359 = vunpack.c.l.b16 %v332
      %v360 = vunpack.c.l.b16 %v333
      %v361 = vunpack.c.l.b16 %v334
      %v362 = vpack.c.b16 %v355, %v354
      %v363 = vpack.c.b16 %v357, %v356
      %v364 = vpack.c.b16 %v359, %v358
      %v365 = vpack.c.b16 %v361, %v360
      %v374 = vunpack.c.l.b16 %v335
      %v375 = vunpack.c.l.b16 %v336
      %v376 = vunpack.c.l.b16 %v337
      %v377 = vunpack.c.l.b16 %v338
      %v378 = vunpack.c.l.b16 %v339
      %v379 = vunpack.c.l.b16 %v340
      %v380 = vunpack.c.l.b16 %v341
      %v381 = vunpack.c.l.b16 %v342
      %v382 = vpack.c.b16 %v375, %v374
      %v383 = vpack.c.b16 %v377, %v376
      %v384 = vpack.c.b16 %v379, %v378
      %v385 = vpack.c.b16 %v381, %v380
      %vm390 = vcmask 523264
      %v392 = vsel %vm390, %v362, 0
      %v395 = vsel %vm390, %v363, 0
      %v398 = vsel %vm390, %v364, 0
      %v401 = vsel %vm390, %v365, 0
      %403 = vmatprep.subr.bf16.mxu0 0
      %404 = vmatpush1.bf16.msra.mxu0 %v382
      %405 = vmatprep.subr.bf16.mxu0 0
      %406 = vmatpush1.bf16.msra.mxu0 %v383
      %407 = vmatprep.subr.bf16.mxu0 0
      %408 = vmatpush1.bf16.msra.mxu0 %v384
      %409 = vmatprep.subr.bf16.mxu0 0
      %410 = vmatpush1.bf16.msra.mxu0 %v385
      %411 = vmatprep.subr.bf16.mxu0 0
      %412 = vmatpush1.bf16.msra.mxu0 0
      %413 = vmatprep.subr.bf16.mxu0 0
      %414 = vmatpush1.bf16.msra.mxu0 0
      %415 = vmatprep.subr.bf16.mxu0 0
      %416 = vmatpush1.bf16.msra.mxu0 0
      %417 = vmatprep.subr.bf16.mxu0 0
      %418 = vmatpush1.bf16.msra.mxu0 0
      %419 = vmatprep.subr.bf16.mxu0 0
      %420 = vmatpush1.bf16.msra.mxu0 0
      %421 = vmatprep.subr.bf16.mxu0 0
      %422 = vmatpush1.bf16.msra.mxu0 0
      %423 = vmatprep.subr.bf16.mxu0 0
      %424 = vmatpush1.bf16.msra.mxu0 0
      %425 = vmatprep.subr.bf16.mxu0 0
      %426 = vmatpush1.bf16.msra.mxu0 0
      %427 = vmatprep.subr.bf16.mxu0 0
      %428 = vmatpush1.bf16.msra.mxu0 0
      %429 = vmatprep.subr.bf16.mxu0 0
      %430 = vmatpush1.bf16.msra.mxu0 0
      %431 = vmatprep.subr.bf16.mxu0 0
      %432 = vmatpush1.bf16.msra.mxu0 0
      %433 = vmatprep.subr.bf16.mxu0 0
      %434 = vmatpush1.bf16.msra.mxu0 0
      %435 = vmatprep.mubr.bf16.mxu0 0
      %436 = vmatmul.mubr.bf16.gmra.mrb[0].mxu0 %v392
      %v437 = vpop.f32.mrb[0].mxu0
      %v438 = vadd.f32 0.0, %v437
      %v439 = vpop.f32.mrb[0].mxu0
      %v440 = vpop.f32.mrb[0].mxu0
      %v441 = vadd.f32 0.0, %v440
      %v442 = vpop.f32.mrb[0].mxu0
      %443 = vmatprep.mubr.bf16.mxu0 0
      %444 = vmatmul.mubr.bf16.gmra.mrb[0].mxu0 %v395
      %v445 = vpop.f32.mrb[0].mxu0
      %v446 = vadd.f32 0.0, %v445
      %v447 = vpop.f32.mrb[0].mxu0
      %v448 = vpop.f32.mrb[0].mxu0
      %v449 = vadd.f32 0.0, %v448
      %v450 = vpop.f32.mrb[0].mxu0
      %451 = vmatprep.mubr.bf16.mxu0 0
      %452 = vmatmul.mubr.bf16.gmra.mrb[0].mxu0 %v398
      %v453 = vpop.f32.mrb[0].mxu0
      %v454 = vadd.f32 0.0, %v453
      %v455 = vpop.f32.mrb[0].mxu0
      %v456 = vpop.f32.mrb[0].mxu0
      %v457 = vadd.f32 0.0, %v456
      %v458 = vpop.f32.mrb[0].mxu0
      %459 = vmatprep.mubr.bf16.mxu0 0
      %460 = vmatmul.mubr.bf16.gmra.mrb[0].mxu0 %v401
      %v461 = vpop.f32.mrb[0].mxu0
      %v462 = vadd.f32 0.0, %v461
      %v463 = vpop.f32.mrb[0].mxu0
      %v464 = vpop.f32.mrb[0].mxu0
      %v465 = vadd.f32 0.0, %v464
      %v466 = vpop.f32.mrb[0].mxu0
      %467 = vdwg.mxu0
      %v468 = vpack.c.bf16 %v441, %v438
      %v469 = vpack.c.bf16 %v449, %v446
      %v470 = vpack.c.bf16 %v457, %v454
      %v471 = vpack.c.bf16 %v465, %v462
      %v473 = vlaneseq
      %v474 = vshrl.u32 %v473, 7
      %v475 = vsub.s32 0, %v474
      %v476 = vrot.slane %v345, %v475
      %v480 = vunpack.c.l.b16 %v343
      %v481 = vunpack.c.l.b16 %v344
      %v482 = vpack.c.b16 %v481, %v480
      %vm484 = vcmask 130048
      %v486 = vsel %vm484, %v468, 0
      %v489 = vsel %vm484, %v469, 0
      %v492 = vsel %vm484, %v470, 0
      %v495 = vsel %vm484, %v471, 0
      %497 = vmatprep.subr.bf16.mxu0 0
      %498 = vmatpush1.bf16.msra.mxu0 %v482
      %499 = vmatprep.subr.bf16.mxu0 0
      %500 = vmatpush1.bf16.msra.mxu0 0
      %501 = vmatprep.subr.bf16.mxu0 0
      %502 = vmatpush1.bf16.msra.mxu0 0
      %503 = vmatprep.subr.bf16.mxu0 0
      %504 = vmatpush1.bf16.msra.mxu0 0
      %505 = vmatprep.subr.bf16.mxu0 0
      %506 = vmatpush1.bf16.msra.mxu0 0
      %507 = vmatprep.subr.bf16.mxu0 0
      %508 = vmatpush1.bf16.msra.mxu0 0
      %509 = vmatprep.subr.bf16.mxu0 0
      %510 = vmatpush1.bf16.msra.mxu0 0
      %511 = vmatprep.subr.bf16.mxu0 0
      %512 = vmatpush1.bf16.msra.mxu0 0
      %513 = vmatprep.subr.bf16.mxu0 0
      %514 = vmatpush1.bf16.msra.mxu0 0
      %515 = vmatprep.subr.bf16.mxu0 0
      %516 = vmatpush1.bf16.msra.mxu0 0
      %517 = vmatprep.subr.bf16.mxu0 0
      %518 = vmatpush1.bf16.msra.mxu0 0
      %519 = vmatprep.subr.bf16.mxu0 0
      %520 = vmatpush1.bf16.msra.mxu0 0
      %521 = vmatprep.subr.bf16.mxu0 0
      %522 = vmatpush1.bf16.msra.mxu0 0
      %523 = vmatprep.subr.bf16.mxu0 0
      %524 = vmatpush1.bf16.msra.mxu0 0
      %525 = vmatprep.subr.bf16.mxu0 0
      %526 = vmatpush1.bf16.msra.mxu0 0
      %527 = vmatprep.subr.bf16.mxu0 0
      %528 = vmatpush1.bf16.msra.mxu0 0
      %529 = vmatprep.mubr.bf16.mxu0 0
      %530 = vmatmul.mubr.bf16.gmra.mrb[0].mxu0 %v486
      %v531 = vpop.f32.mrb[0].mxu0
      %v532 = vadd.f32 %v476, %v531
      %v533 = vpop.f32.mrb[0].mxu0
      %v534 = vpop.f32.mrb[0].mxu0
      %v535 = vadd.f32 %v476, %v534
      %v536 = vpop.f32.mrb[0].mxu0
      %537 = vmatprep.mubr.bf16.mxu0 0
      %538 = vmatmul.mubr.bf16.gmra.mrb[0].mxu0 %v489
      %v539 = vpop.f32.mrb[0].mxu0
      %v540 = vadd.f32 %v476, %v539
      %v541 = vpop.f32.mrb[0].mxu0
      %v542 = vpop.f32.mrb[0].mxu0
      %v543 = vadd.f32 %v476, %v542
      %v544 = vpop.f32.mrb[0].mxu0
      %545 = vmatprep.mubr.bf16.mxu0 0
      %546 = vmatmul.mubr.bf16.gmra.mrb[0].mxu0 %v492
      %v547 = vpop.f32.mrb[0].mxu0
      %v548 = vadd.f32 %v476, %v547
      %v549 = vpop.f32.mrb[0].mxu0
      %v550 = vpop.f32.mrb[0].mxu0
      %v551 = vadd.f32 %v476, %v550
      %v552 = vpop.f32.mrb[0].mxu0
      %553 = vmatprep.mubr.bf16.mxu0 0
      %554 = vmatmul.mubr.bf16.gmra.mrb[0].mxu0 %v495
      %v555 = vpop.f32.mrb[0].mxu0
      %v556 = vadd.f32 %v476, %v555
      %v557 = vpop.f32.mrb[0].mxu0
      %v558 = vpop.f32.mrb[0].mxu0
      %v559 = vadd.f32 %v476, %v558
      %v560 = vpop.f32.mrb[0].mxu0
      %561 = vdwg.mxu0
      %v562 = vmax.f32 %v532, 0.0
      %v563 = vmax.f32 %v535, 0.0
      %v564 = vmax.f32 %v540, 0.0
      %v565 = vmax.f32 %v543, 0.0
      %v566 = vmax.f32 %v548, 0.0
      %v567 = vmax.f32 %v551, 0.0
      %v568 = vmax.f32 %v556, 0.0
      %v569 = vmax.f32 %v559, 0.0
      %v570 = vpack.c.bf16 %v563, %v562
      %v571 = vpack.c.bf16 %v565, %v564
      %v572 = vpack.c.bf16 %v567, %v566
      %v573 = vpack.c.bf16 %v569, %v568
      %v574 = vld [vmem:[%s4] sm:$0xf]
      %v575 = vld [vmem:[%s4 + $0x4] sm:$0xf]
      %v576 = vld [vmem:[%s4 + $0x8] sm:$0xf]
      %v577 = vld [vmem:[%s4 + $0xc] sm:$0xf]
      %v578 = vld [vmem:[%s5] sm:$0x1]
      %579 = vmatprep.subr.bf16.mxu0 0
      %580 = vmatpush1.bf16.msra.mxu0 %v570
      %581 = vmatprep.subr.bf16.mxu0 0
      %582 = vmatpush1.bf16.msra.mxu0 %v571
      %583 = vmatprep.subr.bf16.mxu0 0
      %584 = vmatpush1.bf16.msra.mxu0 %v572
      %585 = vmatprep.subr.bf16.mxu0 0
      %586 = vmatpush1.bf16.msra.mxu0 %v573
      %587 = vmatprep.subr.bf16.mxu0 0
      %588 = vmatpush1.bf16.msra.mxu0 0
      %589 = vmatprep.subr.bf16.mxu0 0
      %590 = vmatpush1.bf16.msra.mxu0 0
      %591 = vmatprep.subr.bf16.mxu0 0
      %592 = vmatpush1.bf16.msra.mxu0 0
      %593 = vmatprep.subr.bf16.mxu0 0
      %594 = vmatpush1.bf16.msra.mxu0 0
      %595 = vmatprep.subr.bf16.mxu0 0
      %596 = vmatpush1.bf16.msra.mxu0 0
      %597 = vmatprep.subr.bf16.mxu0 0
      %598 = vmatpush1.bf16.msra.mxu0 0
      %599 = vmatprep.subr.bf16.mxu0 0
      %600 = vmatpush1.bf16.msra.mxu0 0
      %601 = vmatprep.subr.bf16.mxu0 0
      %602 = vmatpush1.bf16.msra.mxu0 0
      %603 = vmatprep.subr.bf16.mxu0 0
      %604 = vmatpush1.bf16.msra.mxu0 0
      %605 = vmatprep.subr.bf16.mxu0 0
      %606 = vmatpush1.bf16.msra.mxu0 0
      %607 = vmatprep.subr.bf16.mxu0 0
      %608 = vmatpush1.bf16.msra.mxu0 0
      %609 = vmatprep.subr.bf16.mxu0 0
      %610 = vmatpush1.bf16.msra.mxu0 0
      %611 = vmatprep.mubr.bf16.mxu0 0
      %612 = vmatmul.mubr.bf16.gmra.mrb[0].mxu0 %v392
      %v613 = vpop.f32.mrb[0].mxu0
      %v614 = vadd.f32 0.0, %v613
      %v615 = vpop.f32.mrb[0].mxu0
      %v616 = vpop.f32.mrb[0].mxu0
      %v617 = vadd.f32 0.0, %v616
      %v618 = vpop.f32.mrb[0].mxu0
      %619 = vmatprep.mubr.bf16.mxu0 0
      %620 = vmatmul.mubr.bf16.gmra.mrb[0].mxu0 %v395
      %v621 = vpop.f32.mrb[0].mxu0
      %v622 = vadd.f32 0.0, %v621
      %v623 = vpop.f32.mrb[0].mxu0
      %v624 = vpop.f32.mrb[0].mxu0
      %v625 = vadd.f32 0.0, %v624
      %v626 = vpop.f32.mrb[0].mxu0
      %627 = vmatprep.mubr.bf16.mxu0 0
      %628 = vmatmul.mubr.bf16.gmra.mrb[0].mxu0 %v398
      %v629 = vpop.f32.mrb[0].mxu0
      %v630 = vadd.f32 0.0, %v629
      %v631 = vpop.f32.mrb[0].mxu0
      %v632 = vpop.f32.mrb[0].mxu0
      %v633 = vadd.f32 0.0, %v632
      %v634 = vpop.f32.mrb[0].mxu0
      %635 = vmatprep.mubr.bf16.mxu0 0
      %636 = vmatmul.mubr.bf16.gmra.mrb[0].mxu0 %v401
      %v637 = vpop.f32.mrb[0].mxu0
      %v638 = vadd.f32 0.0, %v637
      %v639 = vpop.f32.mrb[0].mxu0
      %v640 = vpop.f32.mrb[0].mxu0
      %v641 = vadd.f32 0.0, %v640
      %v642 = vpop.f32.mrb[0].mxu0
      %643 = vdwg.mxu0
      %v644 = vpack.c.bf16 %v617, %v614
      %v645 = vpack.c.bf16 %v625, %v622
      %v646 = vpack.c.bf16 %v633, %v630
      %v647 = vpack.c.bf16 %v641, %v638
      %v649 = vlaneseq
      %v650 = vshrl.u32 %v649, 7
      %v651 = vsub.s32 0, %v650
      %v652 = vrot.slane %v578, %v651
      %v658 = vunpack.c.l.b16 %v574
      %v659 = vunpack.c.l.b16 %v575
      %v660 = vunpack.c.l.b16 %v576
      %v661 = vunpack.c.l.b16 %v577
      %v662 = vpack.c.b16 %v659, %v658
      %v663 = vpack.c.b16 %v661, %v660
      %vm666 = vcmask 261120
      %v668 = vsel %vm666, %v644, 0
      %v671 = vsel %vm666, %v645, 0
      %v674 = vsel %vm666, %v646, 0
      %v677 = vsel %vm666, %v647, 0
      %679 = vmatprep.subr.bf16.mxu0 0
      %680 = vmatpush1.bf16.msra.mxu0 %v662
      %681 = vmatprep.subr.bf16.mxu0 0
      %682 = vmatpush1.bf16.msra.mxu0 %v663
      %683 = vmatprep.subr.bf16.mxu0 0
      %684 = vmatpush1.bf16.msra.mxu0 0
      %685 = vmatprep.subr.bf16.mxu0 0
      %686 = vmatpush1.bf16.msra.mxu0 0
      %687 = vmatprep.subr.bf16.mxu0 0
      %688 = vmatpush1.bf16.msra.mxu0 0
      %689 = vmatprep.subr.bf16.mxu0 0
      %690 = vmatpush1.bf16.msra.mxu0 0
      %691 = vmatprep.subr.bf16.mxu0 0
      %692 = vmatpush1.bf16.msra.mxu0 0
      %693 = vmatprep.subr.bf16.mxu0 0
      %694 = vmatpush1.bf16.msra.mxu0 0
      %695 = vmatprep.subr.bf16.mxu0 0
      %696 = vmatpush1.bf16.msra.mxu0 0
      %697 = vmatprep.subr.bf16.mxu0 0
      %698 = vmatpush1.bf16.msra.mxu0 0
      %699 = vmatprep.subr.bf16.mxu0 0
      %700 = vmatpush1.bf16.msra.mxu0 0
      %701 = vmatprep.subr.bf16.mxu0 0
      %702 = vmatpush1.bf16.msra.mxu0 0
      %703 = vmatprep.subr.bf16.mxu0 0
      %704 = vmatpush1.bf16.msra.mxu0 0
      %705 = vmatprep.subr.bf16.mxu0 0
      %706 = vmatpush1.bf16.msra.mxu0 0
      %707 = vmatprep.subr.bf16.mxu0 0
      %708 = vmatpush1.bf16.msra.mxu0 0
      %709 = vmatprep.subr.bf16.mxu0 0
      %710 = vmatpush1.bf16.msra.mxu0 0
      %711 = vmatprep.mubr.bf16.mxu0 0
      %712 = vmatmul.mubr.bf16.gmra.mrb[0].mxu0 %v668
      %v713 = vpop.f32.mrb[0].mxu0
      %v714 = vadd.f32 %v652, %v713
      %v715 = vpop.f32.mrb[0].mxu0
      %v716 = vpop.f32.mrb[0].mxu0
      %v717 = vadd.f32 %v652, %v716
      %v718 = vpop.f32.mrb[0].mxu0
      %719 = vmatprep.mubr.bf16.mxu0 0
      %720 = vmatmul.mubr.bf16.gmra.mrb[0].mxu0 %v671
      %v721 = vpop.f32.mrb[0].mxu0
      %v722 = vadd.f32 %v652, %v721
      %v723 = vpop.f32.mrb[0].mxu0
      %v724 = vpop.f32.mrb[0].mxu0
      %v725 = vadd.f32 %v652, %v724
      %v726 = vpop.f32.mrb[0].mxu0
      %727 = vmatprep.mubr.bf16.mxu0 0
      %728 = vmatmul.mubr.bf16.gmra.mrb[0].mxu0 %v674
      %v729 = vpop.f32.mrb[0].mxu0
      %v730 = vadd.f32 %v652, %v729
      %v731 = vpop.f32.mrb[0].mxu0
      %v732 = vpop.f32.mrb[0].mxu0
      %v733 = vadd.f32 %v652, %v732
      %v734 = vpop.f32.mrb[0].mxu0
      %735 = vmatprep.mubr.bf16.mxu0 0
      %736 = vmatmul.mubr.bf16.gmra.mrb[0].mxu0 %v677
      %v737 = vpop.f32.mrb[0].mxu0
      %v738 = vadd.f32 %v652, %v737
      %v739 = vpop.f32.mrb[0].mxu0
      %v740 = vpop.f32.mrb[0].mxu0
      %v741 = vadd.f32 %v652, %v740
      %v742 = vpop.f32.mrb[0].mxu0
      %743 = vdwg.mxu0
      %v744 = vmax.f32 %v714, 0.0
      %v745 = vmax.f32 %v717, 0.0
      %v746 = vmax.f32 %v722, 0.0
      %v747 = vmax.f32 %v725, 0.0
      %v748 = vmax.f32 %v730, 0.0
      %v749 = vmax.f32 %v733, 0.0
      %v750 = vmax.f32 %v738, 0.0
      %v751 = vmax.f32 %v741, 0.0
      %v752 = vpack.c.bf16 %v745, %v744
      %v753 = vpack.c.bf16 %v747, %v746
      %v754 = vpack.c.bf16 %v749, %v748
      %v755 = vpack.c.bf16 %v751, %v750
      %v756 = vld [vmem:[%s6] sm:$0xf]
      %v757 = vld [vmem:[%s6 + $0x4] sm:$0xf]
      %v758 = vld [vmem:[%s6 + $0x8] sm:$0xf]
      %v759 = vld [vmem:[%s6 + $0xc] sm:$0xf]
      %v760 = vld [vmem:[%s7] sm:$0x1]
      %v762 = vlaneseq
      %v763 = vshrl.u32 %v762, 7
      %v764 = vsub.s32 0, %v763
      %v765 = vrot.slane %v760, %v764
      %v771 = vunpack.c.l.b16 %v756
      %v772 = vunpack.c.l.b16 %v757
      %v773 = vunpack.c.l.b16 %v758
      %v774 = vunpack.c.l.b16 %v759
      %v775 = vpack.c.b16 %v772, %v771
      %v776 = vpack.c.b16 %v774, %v773
      %v780 = vsel %vm666, %v752, 0
      %v783 = vsel %vm666, %v753, 0
      %v786 = vsel %vm666, %v754, 0
      %v789 = vsel %vm666, %v755, 0
      %791 = vmatprep.subr.bf16.mxu0 0
      %792 = vmatpush1.bf16.msra.mxu0 %v775
      %793 = vmatprep.subr.bf16.mxu0 0
      %794 = vmatpush1.bf16.msra.mxu0 %v776
      %795 = vmatprep.subr.bf16.mxu0 0
      %796 = vmatpush1.bf16.msra.mxu0 0
      %797 = vmatprep.subr.bf16.mxu0 0
      %798 = vmatpush1.bf16.msra.mxu0 0
      %799 = vmatprep.subr.bf16.mxu0 0
      %800 = vmatpush1.bf16.msra.mxu0 0
      %801 = vmatprep.subr.bf16.mxu0 0
      %802 = vmatpush1.bf16.msra.mxu0 0
      %803 = vmatprep.subr.bf16.mxu0 0
      %804 = vmatpush1.bf16.msra.mxu0 0
      %805 = vmatprep.subr.bf16.mxu0 0
      %806 = vmatpush1.bf16.msra.mxu0 0
      %807 = vmatprep.subr.bf16.mxu0 0
      %808 = vmatpush1.bf16.msra.mxu0 0
      %809 = vmatprep.subr.bf16.mxu0 0
      %810 = vmatpush1.bf16.msra.mxu0 0
      %811 = vmatprep.subr.bf16.mxu0 0
      %812 = vmatpush1.bf16.msra.mxu0 0
      %813 = vmatprep.subr.bf16.mxu0 0
      %814 = vmatpush1.bf16.msra.mxu0 0
      %815 = vmatprep.subr.bf16.mxu0 0
      %816 = vmatpush1.bf16.msra.mxu0 0
      %817 = vmatprep.subr.bf16.mxu0 0
      %818 = vmatpush1.bf16.msra.mxu0 0
      %819 = vmatprep.subr.bf16.mxu0 0
      %820 = vmatpush1.bf16.msra.mxu0 0
      %821 = vmatprep.subr.bf16.mxu0 0
      %822 = vmatpush1.bf16.msra.mxu0 0
      %823 = vmatprep.mubr.bf16.mxu0 0
      %824 = vmatmul.mubr.bf16.gmra.mrb[0].mxu0 %v780
      %v825 = vpop.f32.mrb[0].mxu0
      %v826 = vadd.f32 %v765, %v825
      %v827 = vpop.f32.mrb[0].mxu0
      %v828 = vpop.f32.mrb[0].mxu0
      %v829 = vadd.f32 %v765, %v828
      %v830 = vpop.f32.mrb[0].mxu0
      %831 = vmatprep.mubr.bf16.mxu0 0
      %832 = vmatmul.mubr.bf16.gmra.mrb[0].mxu0 %v783
      %v833 = vpop.f32.mrb[0].mxu0
      %v834 = vadd.f32 %v765, %v833
      %v835 = vpop.f32.mrb[0].mxu0
      %v836 = vpop.f32.mrb[0].mxu0
      %v837 = vadd.f32 %v765, %v836
      %v838 = vpop.f32.mrb[0].mxu0
      %839 = vmatprep.mubr.bf16.mxu0 0
      %840 = vmatmul.mubr.bf16.gmra.mrb[0].mxu0 %v786
      %v841 = vpop.f32.mrb[0].mxu0
      %v842 = vadd.f32 %v765, %v841
      %v843 = vpop.f32.mrb[0].mxu0
      %v844 = vpop.f32.mrb[0].mxu0
      %v845 = vadd.f32 %v765, %v844
      %v846 = vpop.f32.mrb[0].mxu0
      %847 = vmatprep.mubr.bf16.mxu0 0
      %848 = vmatmul.mubr.bf16.gmra.mrb[0].mxu0 %v789
      %v849 = vpop.f32.mrb[0].mxu0
      %v850 = vadd.f32 %v765, %v849
      %v851 = vpop.f32.mrb[0].mxu0
      %v852 = vpop.f32.mrb[0].mxu0
      %v853 = vadd.f32 %v765, %v852
      %v854 = vpop.f32.mrb[0].mxu0
      %855 = vdwg.mxu0
      %856 = vmax.xlane.f32.xlu0 %v826
      %v857 = vpop.xlane.xlu0 %856
      %858 = vmax.xlane.f32.xlu0 %v829
      %v859 = vpop.xlane.xlu0 %858
      %860 = vmax.xlane.f32.xlu0 %v834
      %v861 = vpop.xlane.xlu0 %860
      %862 = vmax.xlane.f32.xlu0 %v837
      %v863 = vpop.xlane.xlu0 %862
      %864 = vmax.xlane.f32.xlu0 %v842
      %v865 = vpop.xlane.xlu0 %864
      %866 = vmax.xlane.f32.xlu0 %v845
      %v867 = vpop.xlane.xlu0 %866
      %868 = vmax.xlane.f32.xlu0 %v850
      %v869 = vpop.xlane.xlu0 %868
      %870 = vmax.xlane.f32.xlu0 %v853
      %v871 = vpop.xlane.xlu0 %870
      %v872 = vsub.f32 %v826, %v857
      %v873 = vsub.f32 %v829, %v859
      %v874 = vsub.f32 %v834, %v861
      %v875 = vsub.f32 %v837, %v863
      %v876 = vsub.f32 %v842, %v865
      %v877 = vsub.f32 %v845, %v867
      %v878 = vsub.f32 %v850, %v869
      %v879 = vsub.f32 %v853, %v871
      %v880 = vmul.f32 %v872, 1.442695
      %v881 = vpow.pop %v880
      %v882 = vmul.f32 %v873, 1.442695
      %v883 = vpow.pop %v882
      %v884 = vmul.f32 %v874, 1.442695
      %v885 = vpow.pop %v884
      %v886 = vmul.f32 %v875, 1.442695
      %v887 = vpow.pop %v886
      %v888 = vmul.f32 %v876, 1.442695
      %v889 = vpow.pop %v888
      %v890 = vmul.f32 %v877, 1.442695
      %v891 = vpow.pop %v890
      %v892 = vmul.f32 %v878, 1.442695
      %v893 = vpow.pop %v892
      %v894 = vmul.f32 %v879, 1.442695
      %v895 = vpow.pop %v894
      %896 = vadd.xlane.f32.xlu0 %v881
      %v897 = vpop.xlane.xlu0 %896
      %898 = vadd.xlane.f32.xlu0 %v883
      %v899 = vpop.xlane.xlu0 %898
      %900 = vadd.xlane.f32.xlu0 %v885
      %v901 = vpop.xlane.xlu0 %900
      %902 = vadd.xlane.f32.xlu0 %v887
      %v903 = vpop.xlane.xlu0 %902
      %904 = vadd.xlane.f32.xlu0 %v889
      %v905 = vpop.xlane.xlu0 %904
      %906 = vadd.xlane.f32.xlu0 %v891
      %v907 = vpop.xlane.xlu0 %906
      %908 = vadd.xlane.f32.xlu0 %v893
      %v909 = vpop.xlane.xlu0 %908
      %910 = vadd.xlane.f32.xlu0 %v895
      %v911 = vpop.xlane.xlu0 %910
      %v912 = vlog2.pop %v897
      %v913 = vmul.f32 %v912, 0.6931472
      %v914 = vlog2.pop %v899
      %v915 = vmul.f32 %v914, 0.6931472
      %v916 = vlog2.pop %v901
      %v917 = vmul.f32 %v916, 0.6931472
      %v918 = vlog2.pop %v903
      %v919 = vmul.f32 %v918, 0.6931472
      %v920 = vlog2.pop %v905
      %v921 = vmul.f32 %v920, 0.6931472
      %v922 = vlog2.pop %v907
      %v923 = vmul.f32 %v922, 0.6931472
      %v924 = vlog2.pop %v909
      %v925 = vmul.f32 %v924, 0.6931472
      %v926 = vlog2.pop %v911
      %v927 = vmul.f32 %v926, 0.6931472
      %v928 = vsub.f32 %v872, %v913
      %v929 = vsub.f32 %v873, %v915
      %v930 = vsub.f32 %v874, %v917
      %v931 = vsub.f32 %v875, %v919
      %v932 = vsub.f32 %v876, %v921
      %v933 = vsub.f32 %v877, %v923
      %v934 = vsub.f32 %v878, %v925
      %v935 = vsub.f32 %v879, %v927
      %936 = vst [vmem:[%s325] sm:$0xff] %v928
      %937 = vst [vmem:[%s325 + $0x8] sm:$0xff] %v929
      %938 = vst [vmem:[%s325 + $0x10] sm:$0xff] %v930
      %939 = vst [vmem:[%s325 + $0x18] sm:$0xff] %v931
      %940 = vst [vmem:[%s325 + $0x20] sm:$0xff] %v932
      %941 = vst [vmem:[%s325 + $0x28] sm:$0xff] %v933
      %942 = vst [vmem:[%s325 + $0x30] sm:$0xff] %v934
      %943 = vst [vmem:[%s325 + $0x38] sm:$0xff] %v935
      %p944 = scmp.lt.s32.totalorder %s19, 3
      %s945 = scalar_select %p944, %s19, 3
      %s946 = smul.addr %s945, 8
      %s947 = smul.addr %s946, 8
      %s948 = scalar_lea.vmem %s8, %s947
      // Predicated region
      $region53: #{gcnnet_forward.1} parent=51 // pred_check
        %p949 = pneg %p215
      $region54: #{gcnnet_forward.1} parent=51 // pred_check_branch
        %951 = sbr.rel (%p949) target = $region56
      $region55: #{gcnnet_forward.1} parent=51 // pred_region
        _
      $region56: #{gcnnet_forward.1} parent=51 // pred_fallthru
        _
    $region52: #{gcnnet_forward.1} parent=5 // pred_fallthru
      _
    %p952 = scmp.le.s32.totalorder 2, %s14
    // Predicated region
    $region57: #{gcnnet_forward.1} parent=5 // pred_check
      %p953 = pneg %p952
    $region58: #{gcnnet_forward.1} parent=5 // pred_check_branch
      %955 = sbr.rel (%p953) target = $region60
    $region59: #{gcnnet_forward.1} parent=5 // pred_region
      %s956 = ssub.s32 %s14, 2
      // Predicated region
      $region61: #{gcnnet_forward.1} parent=59 // pred_check
        %p957 = pneg %p221
      $region62: #{gcnnet_forward.1} parent=59 // pred_check_branch
        %959 = sbr.rel (%p957) target = $region64
      $region63: #{gcnnet_forward.1} parent=59 // pred_region
        %p960 = scmp.lt.s32.totalorder %s20, 3
        %s961 = scalar_select %p960, %s20, 3
        %s962 = smul.addr %s961, 8
        %s963 = smul.addr %s962, 8
        %s964 = scalar_lea.vmem %s8, %s963
      $region64: #{gcnnet_forward.1} parent=59 // pred_fallthru
        _
    $region60: #{gcnnet_forward.1} parent=5 // pred_fallthru
      _
  $region6: #{gcnnet_forward.1} parent=0 // loop_footer
    %s18 = sadd.s32 1, %s14
  $region7: #{gcnnet_forward.1} parent=0 // loop_footer_branch
    %13 = sbr.rel target = $region3
  $region8: #{gcnnet_forward.1} parent=0 // loop_exit
    _

</llo_original>
